<compile_context>
chip_gen: v7x
topology: tpu7x:2x2x1
jax: 0.10.0
libtpu: 0.0.40
codegen_flags: <defaults>
</compile_context>

<pallas_src>
import jax
import jax.numpy as jnp
from jax import lax
from jax.experimental import pallas as pl
from jax.experimental.pallas import tpu as pltpu

_MIB = 1024 * 1024


# ----------------------------- kernels --------------------------------------


def _kernel_single_k(x_ref, w_ref, b_ref, y_ref, z_ref, o_ref):
    """K fits in one tile: single matmul + fused bias/add/add epilogue."""
    acc = jnp.dot(x_ref[...], w_ref[...], preferred_element_type=jnp.float32)
    out = (
        acc
        + b_ref[...].astype(jnp.float32)   # bias, broadcast over rows
        + y_ref[...].astype(jnp.float32)   # + other_1
        + z_ref[...].astype(jnp.float32)   # + other_2
    )
    o_ref[...] = out.astype(o_ref.dtype)


def _kernel_multi_k(x_ref, w_ref, b_ref, y_ref, z_ref, o_ref, acc_ref):
    """K-reduction grid axis with an f32 VMEM accumulator."""
    k = pl.program_id(2)

    @pl.when(k == 0)
    def _():
        acc_ref[...] = jnp.zeros_like(acc_ref)

    acc_ref[...] += jnp.dot(x_ref[...], w_ref[...],
                            preferred_element_type=jnp.float32)

    @pl.when(k == pl.num_programs(2) - 1)
    def _():
        out = (
            acc_ref[...]
            + b_ref[...].astype(jnp.float32)
            + y_ref[...].astype(jnp.float32)
            + z_ref[...].astype(jnp.float32)
        )
        o_ref[...] = out.astype(o_ref.dtype)


# --------------------------- tiling helpers ----------------------------------


def _sublane_align(dtype):
    return {4: 8, 2: 16, 1: 32}.get(jnp.dtype(dtype).itemsize, 8)


def _vmem_capacity_bytes():
    """Physical VMEM per TensorCore; conservative 64 MiB if the query fails."""
    try:
        info = pltpu.get_tpu_info()
        cap = getattr(info, "vmem_capacity_bytes", None)
        if cap:
            return int(cap)
    except Exception:
        pass
    return 64 * _MIB


def _legal_tiles(dim, align, cap):
    """Legal tile sizes for `dim` (descending), preferring tiles <= cap.

    A tile is legal if it divides `dim` and is a multiple of `align`, or if it
    equals `dim` itself (full-extent block dims are always legal on TPU).
    """
    tiles = set()
    if dim <= cap:
        tiles.add(dim)
    t = (min(cap, dim) // align) * align
    while t >= align:
        if dim % t == 0:
            tiles.add(t)
        t -= align
    if not tiles:
        tiles.add(dim)  # awkward (prime-ish) dim: full-extent fallback
    return sorted(tiles, reverse=True)


def _working_set_bytes(tm, tn, tk, x_b, w_b, b_b, yz_b, o_b, multi_k):
    """Double-buffered input/output tiles (+ f32 accumulator for multi-K)."""
    ws = 2 * (tm * tk * x_b          # x tile
              + tk * tn * w_b        # weight tile
              + tn * b_b             # bias tile
              + 2 * tm * tn * yz_b   # y and z tiles
              + tm * tn * o_b)       # output tile
    if multi_k:
        ws += tm * tn * 4
    return ws


# ------------------------------ wrapper ---------------------------------------


def linear_add_add(x, w_kn, bias, y, z, *, tm=None, tn=None, tk=None):
    """result = x @ w_kn + bias + y + z

    x:     (M, K)
    w_kn:  (K, N)   -- nn.Linear weight relaid out ONCE (see LinearAddAdd)
    bias:  (N,)
    y, z:  (M, N)
    """
    M, K = x.shape
    Kw, N = w_kn.shape
    assert Kw == K, f"weight shape {w_kn.shape} incompatible with x {x.shape}"
    assert bias.shape == (N,)
    assert y.shape == (M, N) and z.shape == (M, N)

    out_dtype = jnp.result_type(x.dtype, w_kn.dtype, bias.dtype, y.dtype, z.dtype)

    x_b = jnp.dtype(x.dtype).itemsize
    w_b = jnp.dtype(w_kn.dtype).itemsize
    b_b = jnp.dtype(bias.dtype).itemsize
    yz_b = max(jnp.dtype(y.dtype).itemsize, jnp.dtype(z.dtype).itemsize)
    o_b = jnp.dtype(out_dtype).itemsize

    sub = max(_sublane_align(x.dtype), _sublane_align(y.dtype),
              _sublane_align(z.dtype), _sublane_align(out_dtype))

    # Per-generation VMEM budget for the double-buffered working set:
    # v5e/v6e (128 MiB physical) -> ~96 MiB; v7x (64 MiB) -> ~48 MiB.
    cap = _vmem_capacity_bytes()
    budget = max(24 * _MIB, min(cap - 16 * _MIB, 96 * _MIB))

    # Preferred tile caps.  Small-M (decode) is weight-HBM-bound: aim for
    # tk = K and the widest tn the budget allows (fewer, longer weight DMAs
    # and fewer ~0.35us grid steps).  Large-M GEMMs keep tn/tk at 1024.
    decode = M <= 256
    prefer_tm = 512
    prefer_tn = N if decode else 1024
    prefer_tk = K if decode else 1024

    tm_user, tn_user, tk_user = tm, tn, tk
    tm_opts = [tm_user] if tm_user is not None else _legal_tiles(M, sub, prefer_tm)
    tn_opts = [tn_user] if tn_user is not None else _legal_tiles(N, 128, prefer_tn)
    tk_opts = [tk_user] if tk_user is not None else _legal_tiles(K, 128, prefer_tk)

    i_m = i_n = i_k = 0

    def _ws(im, inn, ik):
        return _working_set_bytes(tm_opts[im], tn_opts[inn], tk_opts[ik],
                                  x_b, w_b, b_b, yz_b, o_b,
                                  multi_k=(K // tk_opts[ik] > 1))

    # Shrink tiles (tk/tn first, tm last) until the working set fits the
    # per-generation budget.
    while _ws(i_m, i_n, i_k) > budget:
        can_k = i_k + 1 < len(tk_opts)
        can_n = i_n + 1 < len(tn_opts)
        can_m = i_m + 1 < len(tm_opts)
        if can_k and (not can_n or tk_opts[i_k] >= tn_opts[i_n]):
            i_k += 1
        elif can_n:
            i_n += 1
        elif can_m:
            i_m += 1
        else:
            # Awkward dims forced full-extent tiles past the budget; rely on
            # vmem_limit_bytes (pad/split the dim outside the kernel if this
            # ever fails to fit on v7x).
            break

    tm, tn, tk = tm_opts[i_m], tn_opts[i_n], tk_opts[i_k]

    # Generalised 2-TensorCore heuristic: make sure the parallel grid has at
    # least 2 tiles so v7x's two TensorCores both get work (harmless on 1-TC
    # chips).  Prefer splitting tn (keeps lane-dense stores), else tm.
    if tm_user is None and tn_user is None and (M // tm) * (N // tn) < 2:
        smaller_tn = [t for t in tn_opts if t < tn]
        smaller_tm = [t for t in tm_opts if t < tm]
        if smaller_tn:
            tn = smaller_tn[0]
        elif smaller_tm:
            tm = smaller_tm[0]

    assert M % tm == 0 and N % tn == 0 and K % tk == 0
    assert tm == M or tm % sub == 0
    assert tn == N or tn % 128 == 0
    assert tk == K or tk % 128 == 0

    kt = K // tk
    b2d = bias.reshape(1, N)  # 2-D so it tiles cleanly on TPU

    working = _working_set_bytes(tm, tn, tk, x_b, w_b, b_b, yz_b, o_b, kt > 1)
    # Explicit scoped-VMEM limit: required on v5e (16 MiB default), capped
    # below physical capacity on v7x so Mosaic keeps scratch/semaphore room.
    vmem_limit = int(min(cap - 8 * _MIB, max(32 * _MIB, 2 * working)))

    cost = pl.CostEstimate(
        flops=2 * M * N * K,
        transcendentals=0,
        bytes_accessed=(x.size * x_b + w_kn.size * w_b + bias.size * b_b
                        + y.size * jnp.dtype(y.dtype).itemsize
                        + z.size * jnp.dtype(z.dtype).itemsize
                        + M * N * o_b),
    )

    if kt == 1:
        # Specialised decode/single-K path: 2-D grid, no accumulator scratch,
        # no per-step branches.
        grid_spec = pltpu.PrefetchScalarGridSpec(
            num_scalar_prefetch=0,
            grid=(M // tm, N // tn),
            in_specs=[
                pl.BlockSpec((tm, tk), lambda i, j: (i, 0)),   # x
                pl.BlockSpec((tk, tn), lambda i, j: (0, j)),   # weight (K, N)
                pl.BlockSpec((1, tn), lambda i, j: (0, j)),    # bias
                pl.BlockSpec((tm, tn), lambda i, j: (i, j)),   # y
                pl.BlockSpec((tm, tn), lambda i, j: (i, j)),   # z
            ],
            out_specs=pl.BlockSpec((tm, tn), lambda i, j: (i, j)),
        )
        kernel = _kernel_single_k
        dims = ("parallel", "parallel")
    else:
        # NOTE: if a trace ever shows exposed weight DMA here, add
        # pipeline_mode=pl.Buffered(3) to the x/weight specs; if VMEM becomes
        # binding, drop y/z to pl.Buffered(1) (they are only read at the last
        # k step).  Neither is applied unconditionally.
        grid_spec = pltpu.PrefetchScalarGridSpec(
            num_scalar_prefetch=0,
            grid=(M // tm, N // tn, kt),
            in_specs=[
                pl.BlockSpec((tm, tk), lambda i, j, k: (i, k)),   # x
                pl.BlockSpec((tk, tn), lambda i, j, k: (k, j)),   # weight (K, N)
                pl.BlockSpec((1, tn), lambda i, j, k: (0, j)),    # bias
                pl.BlockSpec((tm, tn), lambda i, j, k: (i, j)),   # y
                pl.BlockSpec((tm, tn), lambda i, j, k: (i, j)),   # z
            ],
            out_specs=pl.BlockSpec((tm, tn), lambda i, j, k: (i, j)),
            scratch_shapes=[pltpu.VMEM((tm, tn), jnp.float32)],
        )
        kernel = _kernel_multi_k
        dims = ("parallel", "parallel", "arbitrary")

    return pl.pallas_call(
        kernel,
        out_shape=jax.ShapeDtypeStruct((M, N), out_dtype),
        grid_spec=grid_spec,
        compiler_params=pltpu.CompilerParams(
            dimension_semantics=dims,
            vmem_limit_bytes=vmem_limit,
        ),
        cost_estimate=cost,
    )(x, w_kn, b2d, y, z)


class LinearAddAdd:
    """JAX/Pallas analogue of ipex.llm.modules.LinearAddAdd.

    Takes the torch.nn.Linear parameters (weight in (N, K) layout, optional
    bias) at construction time; the (N, K) -> (K, N) relayout happens ONCE
    here and is amortised across all forward calls, so the kernel never pays
    a per-call or per-tile weight transpose.
    """

    def __init__(self, weight_nk, bias=None):
        w = jnp.asarray(weight_nk)
        assert w.ndim == 2
        self.w_kn = w.T                      # (K, N), one-time relayout
        n = self.w_kn.shape[1]
        self.bias = (jnp.zeros((n,), self.w_kn.dtype) if bias is None
                     else jnp.asarray(bias))

    def __call__(self, x, y, z, **tile_overrides):
        return linear_add_add(x, self.w_kn, self.bias, y, z, **tile_overrides)


# ------------------------------- test -----------------------------------------


if __name__ == "__main__":
    key = jax.random.PRNGKey(0)

    def run_case(case_key, M, K, N, **tile_overrides):
        kx, kw, kb, ky, kz = jax.random.split(case_key, 5)
        x = jax.random.normal(kx, (M, K), dtype=jnp.float32)
        weight = jax.random.normal(kw, (N, K), dtype=jnp.float32) * 0.05
        bias = jax.random.normal(kb, (N,), dtype=jnp.float32) * 0.05
        y = jax.random.normal(ky, (M, N), dtype=jnp.float32)
        z = jax.random.normal(kz, (M, N), dtype=jnp.float32)

        fused = LinearAddAdd(weight, bias)           # one-time (N,K)->(K,N)
        out = jax.block_until_ready(fused(x, y, z, **tile_overrides))

        ref = (
            lax.dot_general(x, weight, (((1,), (1,)), ((), ())),
                            precision=lax.Precision.HIGHEST,
                            preferred_element_type=jnp.float32)
            + bias + y + z
        )
        assert out.shape == (M, N) and out.dtype == ref.dtype
        assert jnp.allclose(out, ref, atol=1e-2, rtol=1e-2), (
            f"mismatch vs reference for M={M} K={K} N={N}")

    k1, k2 = jax.random.split(key)
    # Decode-like shape: tk = K -> specialised single-K 2-D grid path, plus the
    # generalised >=2-parallel-tiles heuristic (splits tm 16 -> 8).
    run_case(k1, 16, 256, 128)
    # Force the K-reduction (3-D grid + f32 accumulator) path via a tk override.
    run_case(k2, 64, 1024, 512, tk=256)

    print("KERNEL_OK")
</pallas_src>

<mosaic_0001>
module attributes {stable_mosaic.version = 11 : i64} {
  func.func @_kernel_single_k(%arg0: i32, %arg1: i32, %arg2: memref<8x256xf32, #tpu.memory_space<vmem>>, %arg3: memref<256x128xf32, #tpu.memory_space<vmem>>, %arg4: memref<1x128xf32, #tpu.memory_space<vmem>>, %arg5: memref<8x128xf32, #tpu.memory_space<vmem>>, %arg6: memref<8x128xf32, #tpu.memory_space<vmem>>, %arg7: memref<8x128xf32, #tpu.memory_space<vmem>>) attributes {dimension_semantics = [#tpu.dimension_semantics<parallel>, #tpu.dimension_semantics<parallel>], iteration_bounds = array<i64: 2, 1>, scalar_prefetch = 0 : i64, scratch_operands = 0 : i64, tpu.core_type = #tpu.core_type<tc>, window_params = [{transform_indices = @transform_0, window_bounds = array<i64: 8, 256>}, {transform_indices = @transform_1, window_bounds = array<i64: 256, 128>}, {transform_indices = @transform_2, window_bounds = array<i64: 1, 128>}, {transform_indices = @transform_3, window_bounds = array<i64: 8, 128>}, {transform_indices = @transform_4, window_bounds = array<i64: 8, 128>}, {transform_indices = @transform_5, window_bounds = array<i64: 8, 128>}]} {
    %c0 = arith.constant 0 : index
    %c0_0 = arith.constant 0 : index
    %0 = vector.load %arg2[%c0, %c0_0] : memref<8x256xf32, #tpu.memory_space<vmem>>, vector<8x256xf32>
    %c0_1 = arith.constant 0 : index
    %c0_2 = arith.constant 0 : index
    %1 = vector.load %arg3[%c0_1, %c0_2] : memref<256x128xf32, #tpu.memory_space<vmem>>, vector<256x128xf32>
    %cst = arith.constant dense<0.000000e+00> : vector<8x128xf32>
    %2 = tpu.matmul %0, %1, %cst {dimension_numbers = #tpu.dot_dimension_numbers<[1], [0], [0], [1], [0, 0, 1, 1], [], []>} : vector<8x256xf32>, vector<256x128xf32>, vector<8x128xf32> -> vector<8x128xf32>
    %c0_3 = arith.constant 0 : index
    %c0_4 = arith.constant 0 : index
    %3 = vector.load %arg4[%c0_3, %c0_4] : memref<1x128xf32, #tpu.memory_space<vmem>>, vector<1x128xf32>
    %4 = vector.broadcast %3 : vector<1x128xf32> to vector<8x128xf32>
    %5 = arith.addf %2, %4 : vector<8x128xf32>
    %c0_5 = arith.constant 0 : index
    %c0_6 = arith.constant 0 : index
    %6 = vector.load %arg5[%c0_5, %c0_6] : memref<8x128xf32, #tpu.memory_space<vmem>>, vector<8x128xf32>
    %7 = arith.addf %5, %6 : vector<8x128xf32>
    %c0_7 = arith.constant 0 : index
    %c0_8 = arith.constant 0 : index
    %8 = vector.load %arg6[%c0_7, %c0_8] : memref<8x128xf32, #tpu.memory_space<vmem>>, vector<8x128xf32>
    %9 = arith.addf %7, %8 : vector<8x128xf32>
    %c0_9 = arith.constant 0 : index
    %c0_10 = arith.constant 0 : index
    %10 = vector.load %arg7[%c0_9, %c0_10] : memref<8x128xf32, #tpu.memory_space<vmem>>, vector<8x128xf32>
    tpu.vector_store %arg7[%c0_9, %c0_10], %9 {strides = array<i32>} : memref<8x128xf32, #tpu.memory_space<vmem>>, vector<8x128xf32>,
    return
  }
  func.func @transform_0(%arg0: i32, %arg1: i32) -> (i32, i32) {
    %c0_i32 = arith.constant 0 : i32
    %c0_i32_0 = arith.constant 0 : i32
    return %arg0, %c0_i32 : i32, i32
  }
  func.func @transform_1(%arg0: i32, %arg1: i32) -> (i32, i32) {
    %c0_i32 = arith.constant 0 : i32
    %c0_i32_0 = arith.constant 0 : i32
    return %c0_i32, %arg1 : i32, i32
  }
  func.func @transform_2(%arg0: i32, %arg1: i32) -> (i32, i32) {
    %c0_i32 = arith.constant 0 : i32
    %c0_i32_0 = arith.constant 0 : i32
    return %c0_i32, %arg1 : i32, i32
  }
  func.func @transform_3(%arg0: i32, %arg1: i32) -> (i32, i32) {
    %c0_i32 = arith.constant 0 : i32
    return %arg0, %arg1 : i32, i32
  }
  func.func @transform_4(%arg0: i32, %arg1: i32) -> (i32, i32) {
    %c0_i32 = arith.constant 0 : i32
    return %arg0, %arg1 : i32, i32
  }
  func.func @transform_5(%arg0: i32, %arg1: i32) -> (i32, i32) {
    %c0_i32 = arith.constant 0 : i32
    return %arg0, %arg1 : i32, i32
  }
}

</mosaic_0001>

<llo_original>
// kernel: tpu_custom_call.1
$region0: #{tpu_custom_call.1}
  #allocation0 [shape = 'u32[]', space=smem, size = 0x4, offset = 0x4, fixed_abs, tag = 'smem constant byte address 0x4 - core index']
  #allocation1 [shape = 'u32[144,128]{1,0:T(1,128)}', space=vmem, size = 0x12000, scoped, tag = 'internal scratch']
  %s0 = inlined_call_operand.hbm [shape: f32[16,256], index: 0, kind: input, shape index: {}]
  %s1 = inlined_call_operand.hbm [shape: f32[256,128], index: 1, kind: input, shape index: {}]
  %s2 = inlined_call_operand.vmem [shape: f32[1,128], index: 2, kind: input, shape index: {}]
  %s3 = inlined_call_operand.hbm [shape: f32[16,128], index: 3, kind: input, shape index: {}]
  %s4 = inlined_call_operand.hbm [shape: f32[16,128], index: 4, kind: input, shape index: {}]
  %s5 = inlined_call_operand.hbm [shape: f32[16,128], index: 5, kind: output, shape index: {}]
  %s6 = sld [smem:[#allocation0]]
  $region69: #{tpu_custom_call.1} parent=0
    _
  %s8 = ssub.s32 1, %s6
  %s9 = scalar_select 0, %s8, %s6
  $region1: #{tpu_custom_call.1} parent=0
    #allocation2 [shape = 'u8[16384]{0}', space=vmem, size = 0x4000, scoped, tag = 'input window, operand 0']
    #allocation3 [shape = 's32[2]{0}', space=sflag, size = 0x8, scoped, tag = 'scoped memory for tpu_custom_call.1']
    #allocation4 [shape = 's32[2]{0}', space=sflag, size = 0x8, scoped, tag = 'scoped memory for tpu_custom_call.1']
    #allocation5 [shape = 'u8[131072]{0}', space=vmem, size = 0x20000, scoped, tag = 'input window, operand 1, single buffered']
    #allocation6 [shape = 's32[1]{0}', space=sflag, size = 0x4, scoped, tag = 'scoped memory for tpu_custom_call.1']
    #allocation7 [shape = 'u8[8192]{0}', space=vmem, size = 0x2000, scoped, tag = 'input window, operand 3']
    #allocation8 [shape = 'u8[8192]{0}', space=vmem, size = 0x2000, scoped, tag = 'input window, operand 4']
    #allocation9 [shape = 'u8[8192]{0}', space=vmem, size = 0x2000, scoped, tag = 'output window, operand 0']
    %10 = vsyncpa [#allocation3], 0
    %s11 = scalar_lea.sflag [#allocation3], 1
    %12 = vsyncpa %s11, 0
    %13 = vsyncpa [#allocation6], 0
    %14 = vsyncpa [#allocation4], 0
    %s15 = scalar_lea.sflag [#allocation4], 1
    %16 = vsyncpa %s15, 0
    loop: start=0, step=1, limit=4
    $region2: #{tpu_custom_call.1} parent=1 // loop_pre_header
      _
    $region3: #{tpu_custom_call.1} parent=1 // loop_header
      %s18 = sphi 0, %s22
      %p19 = scmp.ge.s32.totalorder %s18, 4
      %s25 = sphi 0, %s37
      %s26 = sphi 0, %s33
      %s27 = sphi 0, %s25
      %s28 = sphi 0, %s26
      %s29 = sphi 0, %s27
      %s30 = sphi 0, %s28
      %s40 = sphi 0, %s42
      %s43 = sphi 0, %s40
      %s44 = sphi 0, %s43
      %s60 = sphi 0, %s44
      %s66 = sphi 0, %s68
      %s69 = sphi 0, %s66
      %s70 = sphi 0, %s69
      %s86 = sphi 0, %s70
      %s92 = sphi 0, %s94
      %s95 = sphi 0, %s92
      %s96 = sphi 0, %s95
      %s112 = sphi 0, %s96
      %s120 = sphi 0, %s122
      %s123 = sphi 0, %s120
      %s124 = sphi 0, %s123
      %s140 = sphi 0, %s124
      %s148 = sphi 0, %s150
      %s151 = sphi 0, %s148
      %s152 = sphi 0, %s151
      %s168 = sphi 0, %s152
      %s176 = sphi 0, %s178
      %s179 = sphi 0, %s176
      %s180 = sphi 0, %s179
      %s196 = sphi 0, %s180
    $region4: #{tpu_custom_call.1} parent=1 // loop_header_branch
      %21 = sbr.rel (%p19) target = $region8
    $region5: #{tpu_custom_call.1} parent=1 // loop_body
      %s23 = ssub.s32 %s18, 1
      %s24 = ssub.s32 %s18, 2
      %s31 = sadd.s32 1, %s26
      %p32 = scmp.ge.s32.totalorder %s31, 1
      %s33 = scalar_select %p32, 0, %s31
      %s34 = sadd.s32 1, %s25
      %s35 = scalar_select %p32, %s34, %s25
      %p36 = scmp.ge.s32.totalorder %s35, 2
      %s37 = scalar_select %p36, 0, %s35
      %s38 = ssub.s32 %s25, %s37
      %p39 = scmp.eq.s32.totalorder %s38, 0
      %s41 = sadd.s32 %s40, 1
      %s42 = scalar_select %p39, %s40, %s41
      %p45 = pneg %p39
      %p46 = scmp.eq.s32.totalorder %s18, 1
      %p47 = por %p45, %p46
      %p48 = scmp.ne.s32.totalorder %s40, %s43
      %p49 = scmp.eq.s32.totalorder %s18, 0
      %p50 = por %p48, %p49
      %p51 = scmp.ne.s32.totalorder %s40, %s43
      %p52 = scmp.eq.s32.totalorder %s23, 1
      %p53 = por %p51, %p52
      %p54 = scmp.ne.s32.totalorder %s43, %s44
      %p55 = scmp.eq.s32.totalorder %s23, 0
      %p56 = por %p54, %p55
      %p57 = scmp.ne.s32.totalorder %s43, %s44
      %p58 = scmp.eq.s32.totalorder %s24, 1
      %p59 = por %p57, %p58
      %p61 = scmp.ne.s32.totalorder %s44, %s60
      %p62 = scmp.eq.s32.totalorder %s24, 0
      %p63 = por %p61, %p62
      %s64 = ssub.s32 %s26, %s33
      %p65 = scmp.eq.s32.totalorder %s64, 0
      %s67 = sadd.s32 %s66, 1
      %s68 = scalar_select %p65, %s66, %s67
      %p71 = pneg %p65
      %p72 = scmp.eq.s32.totalorder %s18, 1
      %p73 = por %p71, %p72
      %p74 = scmp.ne.s32.totalorder %s66, %s69
      %p75 = scmp.eq.s32.totalorder %s18, 0
      %p76 = por %p74, %p75
      %p77 = scmp.ne.s32.totalorder %s66, %s69
      %p78 = scmp.eq.s32.totalorder %s23, 1
      %p79 = por %p77, %p78
      %p80 = scmp.ne.s32.totalorder %s69, %s70
      %p81 = scmp.eq.s32.totalorder %s23, 0
      %p82 = por %p80, %p81
      %p83 = scmp.ne.s32.totalorder %s69, %s70
      %p84 = scmp.eq.s32.totalorder %s24, 1
      %p85 = por %p83, %p84
      %p87 = scmp.ne.s32.totalorder %s70, %s86
      %p88 = scmp.eq.s32.totalorder %s24, 0
      %p89 = por %p87, %p88
      %s90 = ssub.s32 %s26, %s33
      %p91 = scmp.eq.s32.totalorder %s90, 0
      %s93 = sadd.s32 %s92, 1
      %s94 = scalar_select %p91, %s92, %s93
      %p97 = pneg %p91
      %p98 = scmp.eq.s32.totalorder %s18, 1
      %p99 = por %p97, %p98
      %p100 = scmp.ne.s32.totalorder %s92, %s95
      %p101 = scmp.eq.s32.totalorder %s18, 0
      %p102 = por %p100, %p101
      %p103 = scmp.ne.s32.totalorder %s92, %s95
      %p104 = scmp.eq.s32.totalorder %s23, 1
      %p105 = por %p103, %p104
      %p106 = scmp.ne.s32.totalorder %s95, %s96
      %p107 = scmp.eq.s32.totalorder %s23, 0
      %p108 = por %p106, %p107
      %p109 = scmp.ne.s32.totalorder %s95, %s96
      %p110 = scmp.eq.s32.totalorder %s24, 1
      %p111 = por %p109, %p110
      %p113 = scmp.ne.s32.totalorder %s96, %s112
      %p114 = scmp.eq.s32.totalorder %s24, 0
      %p115 = por %p113, %p114
      %s116 = ssub.s32 %s25, %s37
      %s117 = ssub.s32 %s26, %s33
      %s118 = sor.u32 %s116, %s117
      %p119 = scmp.eq.s32.totalorder %s118, 0
      %s121 = sadd.s32 %s120, 1
      %s122 = scalar_select %p119, %s120, %s121
      %p125 = pneg %p119
      %p126 = scmp.eq.s32.totalorder %s18, 1
      %p127 = por %p125, %p126
      %p128 = scmp.ne.s32.totalorder %s120, %s123
      %p129 = scmp.eq.s32.totalorder %s18, 0
      %p130 = por %p128, %p129
      %p131 = scmp.ne.s32.totalorder %s120, %s123
      %p132 = scmp.eq.s32.totalorder %s23, 1
      %p133 = por %p131, %p132
      %p134 = scmp.ne.s32.totalorder %s123, %s124
      %p135 = scmp.eq.s32.totalorder %s23, 0
      %p136 = por %p134, %p135
      %p137 = scmp.ne.s32.totalorder %s123, %s124
      %p138 = scmp.eq.s32.totalorder %s24, 1
      %p139 = por %p137, %p138
      %p141 = scmp.ne.s32.totalorder %s124, %s140
      %p142 = scmp.eq.s32.totalorder %s24, 0
      %p143 = por %p141, %p142
      %s144 = ssub.s32 %s25, %s37
      %s145 = ssub.s32 %s26, %s33
      %s146 = sor.u32 %s144, %s145
      %p147 = scmp.eq.s32.totalorder %s146, 0
      %s149 = sadd.s32 %s148, 1
      %s150 = scalar_select %p147, %s148, %s149
      %p153 = pneg %p147
      %p154 = scmp.eq.s32.totalorder %s18, 1
      %p155 = por %p153, %p154
      %p156 = scmp.ne.s32.totalorder %s148, %s151
      %p157 = scmp.eq.s32.totalorder %s18, 0
      %p158 = por %p156, %p157
      %p159 = scmp.ne.s32.totalorder %s148, %s151
      %p160 = scmp.eq.s32.totalorder %s23, 1
      %p161 = por %p159, %p160
      %p162 = scmp.ne.s32.totalorder %s151, %s152
      %p163 = scmp.eq.s32.totalorder %s23, 0
      %p164 = por %p162, %p163
      %p165 = scmp.ne.s32.totalorder %s151, %s152
      %p166 = scmp.eq.s32.totalorder %s24, 1
      %p167 = por %p165, %p166
      %p169 = scmp.ne.s32.totalorder %s152, %s168
      %p170 = scmp.eq.s32.totalorder %s24, 0
      %p171 = por %p169, %p170
      %s172 = ssub.s32 %s25, %s37
      %s173 = ssub.s32 %s26, %s33
      %s174 = sor.u32 %s172, %s173
      %p175 = scmp.eq.s32.totalorder %s174, 0
      %s177 = sadd.s32 %s176, 1
      %s178 = scalar_select %p175, %s176, %s177
      %p181 = pneg %p175
      %p182 = scmp.eq.s32.totalorder %s18, 1
      %p183 = por %p181, %p182
      %p184 = scmp.ne.s32.totalorder %s176, %s179
      %p185 = scmp.eq.s32.totalorder %s18, 0
      %p186 = por %p184, %p185
      %p187 = scmp.ne.s32.totalorder %s176, %s179
      %p188 = scmp.eq.s32.totalorder %s23, 1
      %p189 = por %p187, %p188
      %p190 = scmp.ne.s32.totalorder %s179, %s180
      %p191 = scmp.eq.s32.totalorder %s23, 0
      %p192 = por %p190, %p191
      %p193 = scmp.ne.s32.totalorder %s179, %s180
      %p194 = scmp.eq.s32.totalorder %s24, 1
      %p195 = por %p193, %p194
      %p197 = scmp.ne.s32.totalorder %s180, %s196
      %p198 = scmp.eq.s32.totalorder %s24, 0
      %p199 = por %p197, %p198
      %p200 = scmp.le.s32.totalorder 1, %s18
      %p201 = scmp.lt.s32.totalorder %s18, 3
      %p202 = pnand %p200, %p201
      %p203 = pneg %p202
      // Predicated region
      $region9: #{tpu_custom_call.1} parent=5 // pred_check
        _
      $region10: #{tpu_custom_call.1} parent=5 // pred_check_branch
        %205 = sbr.rel (%p202) target = $region12
      $region11: #{tpu_custom_call.1} parent=5 // pred_region
        %s206 = ssub.s32 %s18, 1
        // Predicated region
        $region13: #{tpu_custom_call.1} parent=11 // pred_check
          %p207 = pneg %p82
        $region14: #{tpu_custom_call.1} parent=11 // pred_check_branch
          %209 = sbr.rel (%p207) target = $region16
        $region15: #{tpu_custom_call.1} parent=11 // pred_region
          %s211 = ssub.s32 4096, 4096
          %212 = vsyncadd [#allocation6], %s211
          %s213 = smul.addr %s28, 128
          %s214 = scalar_lea.hbm %s1, %s213
          %s215 = sshll.u32 [#allocation5], 4
          %s216 = int_to_ptr.vmem [resolvable:$true] %s215
          %221 = dma.hbm_to_vmem [thread:$0]  %s214, 4096, %s216, [#allocation6], 128, 128, 8
        $region16: #{tpu_custom_call.1} parent=11 // pred_fallthru
          _
        // Predicated region
        $region17: #{tpu_custom_call.1} parent=11 // pred_check
          %p222 = pneg %p108
        $region18: #{tpu_custom_call.1} parent=11 // pred_check_branch
          %224 = sbr.rel (%p222) target = $region20
        $region19: #{tpu_custom_call.1} parent=11 // pred_region
          %p225 = scmp.lt.s32.totalorder %s28, 0
          %s226 = scalar_select %p225, %s28, 0
          %s227 = scalar_lea.vmem %s2, %s226
        $region20: #{tpu_custom_call.1} parent=11 // pred_fallthru
          _
      $region12: #{tpu_custom_call.1} parent=5 // pred_fallthru
        _
      %p228 = scmp.lt.s32.totalorder %s18, 2
      // Predicated region
      $region21: #{tpu_custom_call.1} parent=5 // pred_check
        %p229 = pneg %p228
      $region22: #{tpu_custom_call.1} parent=5 // pred_check_branch
        %231 = sbr.rel (%p229) target = $region24
      $region23: #{tpu_custom_call.1} parent=5 // pred_region
        // Predicated region
        $region25: #{tpu_custom_call.1} parent=23 // pred_check
          %p232 = pneg %p50
        $region26: #{tpu_custom_call.1} parent=23 // pred_check_branch
          %234 = sbr.rel (%p232) target = $region28
        $region27: #{tpu_custom_call.1} parent=23 // pred_region
          %s235 = sand.u32 %s18, 1
          %s236 = scalar_lea.sflag [#allocation3], %s235
          %s237 = sand.u32 %s40, 1
          %s238 = smul.addr %s237, 16
          %s239 = scalar_lea.vmem [#allocation2], %s238
          %s241 = ssub.s32 256, 256
          %242 = vsyncadd %s236, %s241
          %s243 = smul.addr %s25, 2
          %s244 = smul.addr %s243, 128
          %s245 = scalar_lea.hbm %s0, %s244
          %s247 = sshll.u32 %s239, 4
          %s248 = int_to_ptr.vmem [resolvable:$true] %s247
          %250 = dma.hbm_to_vmem [thread:$0]  %s245, 256, %s248, %s236
        $region28: #{tpu_custom_call.1} parent=23 // pred_fallthru
          _
        // Predicated region
        $region29: #{tpu_custom_call.1} parent=23 // pred_check
          %p251 = pneg %p130
        $region30: #{tpu_custom_call.1} parent=23 // pred_check_branch
          %253 = sbr.rel (%p251) target = $region32
        $region31: #{tpu_custom_call.1} parent=23 // pred_region
          %s254 = sand.u32 %s18, 1
          %s255 = scalar_lea.sflag [#allocation3], %s254
          %s256 = sand.u32 %s120, 1
          %s257 = smul.addr %s256, 8
          %s258 = scalar_lea.vmem [#allocation7], %s257
          %s260 = ssub.s32 128, 128
          %261 = vsyncadd %s255, %s260
          %s262 = sadd.s32 %s26, %s25
          %s263 = smul.addr %s262, 128
          %s264 = scalar_lea.hbm %s3, %s263
          %s266 = sshll.u32 %s258, 4
          %s267 = int_to_ptr.vmem [resolvable:$true] %s266
          %269 = dma.hbm_to_vmem [thread:$0]  %s264, 128, %s267, %s255
        $region32: #{tpu_custom_call.1} parent=23 // pred_fallthru
          _
        // Predicated region
        $region33: #{tpu_custom_call.1} parent=23 // pred_check
          %p270 = pneg %p158
        $region34: #{tpu_custom_call.1} parent=23 // pred_check_branch
          %272 = sbr.rel (%p270) target = $region36
        $region35: #{tpu_custom_call.1} parent=23 // pred_region
          %s273 = sand.u32 %s18, 1
          %s274 = scalar_lea.sflag [#allocation3], %s273
          %s275 = sand.u32 %s148, 1
          %s276 = smul.addr %s275, 8
          %s277 = scalar_lea.vmem [#allocation8], %s276
          %s279 = ssub.s32 128, 128
          %280 = vsyncadd %s274, %s279
          %s281 = sadd.s32 %s26, %s25
          %s282 = smul.addr %s281, 128
          %s283 = scalar_lea.hbm %s4, %s282
          %s285 = sshll.u32 %s277, 4
          %s286 = int_to_ptr.vmem [resolvable:$true] %s285
          %288 = dma.hbm_to_vmem [thread:$0]  %s283, 128, %s286, %s274
        $region36: #{tpu_custom_call.1} parent=23 // pred_fallthru
          _
      $region24: #{tpu_custom_call.1} parent=5 // pred_fallthru
        _
      %p289 = scmp.le.s32.totalorder 1, %s18
      %p290 = scmp.lt.s32.totalorder %s18, 3
      %p291 = pnand %p289, %p290
      %p292 = pneg %p291
      // Predicated region
      $region37: #{tpu_custom_call.1} parent=5 // pred_check
        _
      $region38: #{tpu_custom_call.1} parent=5 // pred_check_branch
        %294 = sbr.rel (%p291) target = $region40
      $region39: #{tpu_custom_call.1} parent=5 // pred_region
        %s295 = ssub.s32 %s18, 1
        %s296 = sand.u32 %s23, 1
        %s297 = scalar_lea.sflag [#allocation3], %s296
        %s298 = sand.u32 %s43, 1
        %s299 = smul.addr %s298, 16
        %s300 = scalar_lea.vmem [#allocation2], %s299
        // Predicated region
        $region41: #{tpu_custom_call.1} parent=39 // pred_check
          %p301 = pneg %p56
        $region42: #{tpu_custom_call.1} parent=39 // pred_check_branch
          %303 = sbr.rel (%p301) target = $region44
        $region43: #{tpu_custom_call.1} parent=39 // pred_region
          %304 = dma.done %s297, 256
        $region44: #{tpu_custom_call.1} parent=39 // pred_fallthru
          _
        // Predicated region
        $region45: #{tpu_custom_call.1} parent=39 // pred_check
          %p305 = pneg %p82
        $region46: #{tpu_custom_call.1} parent=39 // pred_check_branch
          %307 = sbr.rel (%p305) target = $region48
        $region47: #{tpu_custom_call.1} parent=39 // pred_region
          %308 = dma.done [#allocation6], 4096
        $region48: #{tpu_custom_call.1} parent=39 // pred_fallthru
          _
        %s309 = sand.u32 %s23, 1
        %s310 = scalar_lea.sflag [#allocation3], %s309
        %s311 = sand.u32 %s123, 1
        %s312 = smul.addr %s311, 8
        %s313 = scalar_lea.vmem [#allocation7], %s312
        // Predicated region
        $region49: #{tpu_custom_call.1} parent=39 // pred_check
          %p314 = pneg %p136
        $region50: #{tpu_custom_call.1} parent=39 // pred_check_branch
          %316 = sbr.rel (%p314) target = $region52
        $region51: #{tpu_custom_call.1} parent=39 // pred_region
          %317 = dma.done %s310, 128
        $region52: #{tpu_custom_call.1} parent=39 // pred_fallthru
          _
        %s318 = sand.u32 %s23, 1
        %s319 = scalar_lea.sflag [#allocation3], %s318
        %s320 = sand.u32 %s151, 1
        %s321 = smul.addr %s320, 8
        %s322 = scalar_lea.vmem [#allocation8], %s321
        // Predicated region
        $region53: #{tpu_custom_call.1} parent=39 // pred_check
          %p323 = pneg %p164
        $region54: #{tpu_custom_call.1} parent=39 // pred_check_branch
          %325 = sbr.rel (%p323) target = $region56
        $region55: #{tpu_custom_call.1} parent=39 // pred_region
          %326 = dma.done %s319, 128
        $region56: #{tpu_custom_call.1} parent=39 // pred_fallthru
          _
        %s327 = sand.u32 %s23, 1
        %s328 = scalar_lea.sflag [#allocation3], %s327
        %s329 = sand.u32 %s43, 1
        %s330 = smul.addr %s329, 16
        %s331 = scalar_lea.vmem [#allocation2], %s330
        %p332 = pneg %p56
        %p333 = pneg %p53
        %p334 = pneg %p82
        %p335 = pneg %p79
        %p336 = scmp.lt.s32.totalorder %s28, 0
        %s337 = scalar_select %p336, %s28, 0
        %s338 = scalar_lea.vmem %s2, %s337
        %p339 = pneg %p108
        %p340 = pneg %p105
        %s341 = sand.u32 %s23, 1
        %s342 = scalar_lea.sflag [#allocation3], %s341
        %s343 = sand.u32 %s123, 1
        %s344 = smul.addr %s343, 8
        %s345 = scalar_lea.vmem [#allocation7], %s344
        %p346 = pneg %p136
        %p347 = pneg %p133
        %s348 = sand.u32 %s23, 1
        %s349 = scalar_lea.sflag [#allocation3], %s348
        %s350 = sand.u32 %s151, 1
        %s351 = smul.addr %s350, 8
        %s352 = scalar_lea.vmem [#allocation8], %s351
        %p353 = pneg %p164
        %p354 = pneg %p161
        %p355 = pneg %p192
        %p356 = pneg %p189
        %s357 = sand.u32 %s179, 1
        %s358 = scalar_lea.sflag [#allocation4], %s357
        %s359 = sand.u32 %s179, 1
        %s360 = smul.addr %s359, 8
        %s361 = scalar_lea.vmem [#allocation9], %s360
        %p362 = scmp.lt.s32.totalorder %s28, 0
        %s363 = scalar_select %p362, %s28, 0
        %s364 = scalar_lea.vmem %s2, %s363
        %v365 = vld [vmem:[%s300] sm:$0xff]
        %v366 = vld [vmem:[%s300 + $0x8] sm:$0xff]
        %v367 = vld [vmem:[#allocation5] sm:$0xff]
        %v368 = vld [vmem:[#allocation5 + $0x8] sm:$0xff]
        %v369 = vld [vmem:[#allocation5 + $0x10] sm:$0xff]
        %v370 = vld [vmem:[#allocation5 + $0x18] sm:$0xff]
        %v371 = vld [vmem:[#allocation5 + $0x20] sm:$0xff]
        %v372 = vld [vmem:[#allocation5 + $0x28] sm:$0xff]
        %v373 = vld [vmem:[#allocation5 + $0x30] sm:$0xff]
        %v374 = vld [vmem:[#allocation5 + $0x38] sm:$0xff]
        %v375 = vld [vmem:[#allocation5 + $0x40] sm:$0xff]
        %v376 = vld [vmem:[#allocation5 + $0x48] sm:$0xff]
        %v377 = vld [vmem:[#allocation5 + $0x50] sm:$0xff]
        %v378 = vld [vmem:[#allocation5 + $0x58] sm:$0xff]
        %v379 = vld [vmem:[#allocation5 + $0x60] sm:$0xff]
        %v380 = vld [vmem:[#allocation5 + $0x68] sm:$0xff]
        %v381 = vld [vmem:[#allocation5 + $0x70] sm:$0xff]
        %v382 = vld [vmem:[#allocation5 + $0x78] sm:$0xff]
        %v383 = vld [vmem:[#allocation5 + $0x80] sm:$0xff]
        %v384 = vld [vmem:[#allocation5 + $0x88] sm:$0xff]
        %v385 = vld [vmem:[#allocation5 + $0x90] sm:$0xff]
        %v386 = vld [vmem:[#allocation5 + $0x98] sm:$0xff]
        %v387 = vld [vmem:[#allocation5 + $0xa0] sm:$0xff]
        %v388 = vld [vmem:[#allocation5 + $0xa8] sm:$0xff]
        %v389 = vld [vmem:[#allocation5 + $0xb0] sm:$0xff]
        %v390 = vld [vmem:[#allocation5 + $0xb8] sm:$0xff]
        %v391 = vld [vmem:[#allocation5 + $0xc0] sm:$0xff]
        %v392 = vld [vmem:[#allocation5 + $0xc8] sm:$0xff]
        %v393 = vld [vmem:[#allocation5 + $0xd0] sm:$0xff]
        %v394 = vld [vmem:[#allocation5 + $0xd8] sm:$0xff]
        %v395 = vld [vmem:[#allocation5 + $0xe0] sm:$0xff]
        %v396 = vld [vmem:[#allocation5 + $0xe8] sm:$0xff]
        %v397 = vld [vmem:[#allocation5 + $0xf0] sm:$0xff]
        %v398 = vld [vmem:[#allocation5 + $0xf8] sm:$0xff]
        %v399 = vld [vmem:[%s364] sm:$0x1]
        %v401 = vlaneseq
        %v402 = vshrl.u32 %v401, 7
        %v403 = vsub.s32 0, %v402
        %v404 = vrot.slane %v399, %v403
        %406 = vmatprep.subr.mxu0 0.0
        %407 = vmatpush1.msra.mxu0 %v367
        %408 = vmatprep.subr.mxu0 0.0
        %409 = vmatpush1.msra.mxu0 %v368
        %410 = vmatprep.subr.mxu0 0.0
        %411 = vmatpush1.msra.mxu0 %v369
        %412 = vmatprep.subr.mxu0 0.0
        %413 = vmatpush1.msra.mxu0 %v370
        %414 = vmatprep.subr.mxu0 0.0
        %415 = vmatpush1.msra.mxu0 %v371
        %416 = vmatprep.subr.mxu0 0.0
        %417 = vmatpush1.msra.mxu0 %v372
        %418 = vmatprep.subr.mxu0 0.0
        %419 = vmatpush1.msra.mxu0 %v373
        %420 = vmatprep.subr.mxu0 0.0
        %421 = vmatpush1.msra.mxu0 %v374
        %422 = vmatprep.subr.mxu0 0.0
        %423 = vmatpush1.msra.mxu0 %v375
        %424 = vmatprep.subr.mxu0 0.0
        %425 = vmatpush1.msra.mxu0 %v376
        %426 = vmatprep.subr.mxu0 0.0
        %427 = vmatpush1.msra.mxu0 %v377
        %428 = vmatprep.subr.mxu0 0.0
        %429 = vmatpush1.msra.mxu0 %v378
        %430 = vmatprep.subr.mxu0 0.0
        %431 = vmatpush1.msra.mxu0 %v379
        %432 = vmatprep.subr.mxu0 0.0
        %433 = vmatpush1.msra.mxu0 %v380
        %434 = vmatprep.subr.mxu0 0.0
        %435 = vmatpush1.msra.mxu0 %v381
        %436 = vmatprep.subr.mxu0 0.0
        %437 = vmatpush1.msra.mxu0 %v382
        %438 = vmatprep.subr.mxu0 0.0
        %439 = vmatpush1.msra.mxu0 %v383
        %440 = vmatprep.subr.mxu0 0.0
        %441 = vmatpush1.msra.mxu0 %v384
        %442 = vmatprep.subr.mxu0 0.0
        %443 = vmatpush1.msra.mxu0 %v385
        %444 = vmatprep.subr.mxu0 0.0
        %445 = vmatpush1.msra.mxu0 %v386
        %446 = vmatprep.subr.mxu0 0.0
        %447 = vmatpush1.msra.mxu0 %v387
        %448 = vmatprep.subr.mxu0 0.0
        %449 = vmatpush1.msra.mxu0 %v388
        %450 = vmatprep.subr.mxu0 0.0
        %451 = vmatpush1.msra.mxu0 %v389
        %452 = vmatprep.subr.mxu0 0.0
        %453 = vmatpush1.msra.mxu0 %v390
        %454 = vmatprep.subr.mxu0 0.0
        %455 = vmatpush1.msra.mxu0 %v391
        %456 = vmatprep.subr.mxu0 0.0
        %457 = vmatpush1.msra.mxu0 %v392
        %458 = vmatprep.subr.mxu0 0.0
        %459 = vmatpush1.msra.mxu0 %v393
        %460 = vmatprep.subr.mxu0 0.0
        %461 = vmatpush1.msra.mxu0 %v394
        %462 = vmatprep.subr.mxu0 0.0
        %463 = vmatpush1.msra.mxu0 %v395
        %464 = vmatprep.subr.mxu0 0.0
        %465 = vmatpush1.msra.mxu0 %v396
        %466 = vmatprep.subr.mxu0 0.0
        %467 = vmatpush1.msra.mxu0 %v397
        %468 = vmatprep.subr.mxu0 0.0
        %469 = vmatpush1.msra.mxu0 %v398
        %470 = vmatprep.mubr.f32.mxu0 %v366
        %471 = vmatmul.mubr.f32.gmra.mrb[0].mxu0 %v365
        %v472 = vpop.f32.mrb[0].mxu0
        %v473 = vadd.f32 %v404, %v472
        %v474 = vpop.f32.mrb[0].mxu0
        %475 = vdwg.mxu0
        %v476 = vld [vmem:[%s313] sm:$0xff]
        %v477 = vadd.f32 %v473, %v476
        %v478 = vld [vmem:[%s322] sm:$0xff]
        %v479 = vadd.f32 %v477, %v478
        %480 = vst [vmem:[%s361] sm:$0xff] %v479
        %s481 = sand.u32 %s179, 1
        %s482 = scalar_lea.sflag [#allocation4], %s481
        %s483 = sand.u32 %s179, 1
        %s484 = smul.addr %s483, 8
        %s485 = scalar_lea.vmem [#allocation9], %s484
        // Predicated region
        $region57: #{tpu_custom_call.1} parent=39 // pred_check
          %p486 = pneg %p189
        $region58: #{tpu_custom_call.1} parent=39 // pred_check_branch
          %488 = sbr.rel (%p486) target = $region60
        $region59: #{tpu_custom_call.1} parent=39 // pred_region
          %s490 = ssub.s32 128, 128
          %491 = vsyncadd %s482, %s490
          %s492 = sadd.s32 %s28, %s27
          %s493 = smul.addr %s492, 128
          %s494 = scalar_lea.hbm %s5, %s493
          %s496 = sshll.u32 %s485, 4
          %s497 = int_to_ptr.vmem [resolvable:$true] %s496
          %499 = dma.vmem_to_hbm [thread:$0]  %s497, 128, %s494, %s482
        $region60: #{tpu_custom_call.1} parent=39 // pred_fallthru
          _
      $region40: #{tpu_custom_call.1} parent=5 // pred_fallthru
        _
      %p500 = scmp.le.s32.totalorder 2, %s18
      // Predicated region
      $region61: #{tpu_custom_call.1} parent=5 // pred_check
        %p501 = pneg %p500
      $region62: #{tpu_custom_call.1} parent=5 // pred_check_branch
        %503 = sbr.rel (%p501) target = $region64
      $region63: #{tpu_custom_call.1} parent=5 // pred_region
        %s504 = ssub.s32 %s18, 2
        // Predicated region
        $region65: #{tpu_custom_call.1} parent=63 // pred_check
          %p505 = pneg %p195
        $region66: #{tpu_custom_call.1} parent=63 // pred_check_branch
          %507 = sbr.rel (%p505) target = $region68
        $region67: #{tpu_custom_call.1} parent=63 // pred_region
          %s508 = sand.u32 %s180, 1
          %s509 = scalar_lea.sflag [#allocation4], %s508
          %s510 = sand.u32 %s180, 1
          %s511 = smul.addr %s510, 8
          %s512 = scalar_lea.vmem [#allocation9], %s511
          %513 = dma.done %s509, 128
        $region68: #{tpu_custom_call.1} parent=63 // pred_fallthru
          _
      $region64: #{tpu_custom_call.1} parent=5 // pred_fallthru
        _
    $region6: #{tpu_custom_call.1} parent=1 // loop_footer
      %s22 = sadd.s32 1, %s18
    $region7: #{tpu_custom_call.1} parent=1 // loop_footer_branch
      %17 = sbr.rel target = $region3
    $region8: #{tpu_custom_call.1} parent=1 // loop_exit
      _
    %514 = vsyncpa [#allocation3], 1
    %s515 = scalar_lea.sflag [#allocation3], 1
    %516 = vsyncpa %s515, 1
    %517 = vsyncpa [#allocation6], 1
    %518 = vsyncpa [#allocation4], 1
    %s519 = scalar_lea.sflag [#allocation4], 1
    %520 = vsyncpa %s519, 1

</llo_original>
